<compile_context>
chip_gen: v7x
topology: tpu7x:2x2x1
jax: 0.10.0
libtpu: 0.0.40
codegen_flags: <defaults>
</compile_context>

<pallas_src>
import jax
import jax.numpy as jnp
from jax.experimental import pallas as pl
from jax.experimental.pallas import tpu as pltpu


LAYER_NORM_EPS = 1e-12  # BERT-style default for config.layer_norm_eps


def _round_up(x, m):
    return ((x + m - 1) // m) * m


def _pooler_end_logits_kernel(
    h_ref,        # (1, TS, H)        hidden states tile (compute dtype)
    sbias_ref,    # (1, 1|TS, H) f32  precomputed  start @ W0_s + b0
    w0h_ref,      # (H, H)            dense_0 weight rows acting on hidden
    gamma_ref,    # (1, H) f32        LayerNorm weight
    beta_ref,     # (1, H) f32        LayerNorm bias
    w1_ref,       # (1, H) f32        dense_1 weight (as a row)
    b1_ref,       # (1,)   f32 SMEM   dense_1 bias (scalar)
    pmask_ref,    # (1, 1, TS) f32    p_mask row (1.0 == masked)
    o_ref,        # (1, 1, TS) f32    output logits row
):
    h = h_ref[0]                                    # (TS, H)

    # dense_0 on concat([hidden, start]):
    #   concat(h, s) @ W0 = h @ W0_h + (s @ W0_s + b0)
    # The second term is precomputed in the wrapper as one batched matmul.
    x = jnp.dot(h, w0h_ref[...], preferred_element_type=jnp.float32)
    x = x + sbias_ref[0]                            # (1,H) or (TS,H) broadcast

    # Tanh activation (f32).
    x = jnp.tanh(x)

    # LayerNorm over the hidden dim, one-pass statistics.
    m1 = jnp.mean(x, axis=-1, keepdims=True)
    m2 = jnp.mean(x * x, axis=-1, keepdims=True)
    var = m2 - m1 * m1
    x = (x - m1) * jax.lax.rsqrt(var + LAYER_NORM_EPS)
    x = x * gamma_ref[...] + beta_ref[...]

    # dense_1 (H -> 1): VPU multiply + lane reduce; result is a (TS,) row that
    # stores straight into the lane-dense (1, 1, TS) output block.
    logits = jnp.sum(x * w1_ref[...], axis=-1) + b1_ref[0]   # (TS,)

    # p_mask: x * (1 - p) - 1e30 * p   (f32; 1e30 not representable in bf16)
    pm = pmask_ref[0, 0]                            # (TS,)
    logits = logits * (1.0 - pm) - 1e30 * pm

    o_ref[0, 0] = logits.astype(o_ref.dtype)


def pooler_end_logits(hidden_states, params, start_positions=None,
                      start_states=None, p_mask=None,
                      compute_dtype=jnp.bfloat16, tile_s=512):
    """JAX/Pallas equivalent of PoolerEndLogits.forward.

    hidden_states:  (B, S, H) float
    start_positions:(B,) int32   (overrides start_states, as in PyTorch)
    start_states:   (B, S, H)    per-position start-token states
    p_mask:         (B, S) float or None
    returns:        (B, S) float32
    """
    B, S, H = hidden_states.shape
    assert start_states is not None or start_positions is not None, (
        "One of start_states, start_positions should be not None")

    f32 = jnp.float32
    w0 = params["w0"].astype(f32)                  # (2H, H), acts as x_cat @ W0
    w0h, w0s = w0[:H, :], w0[H:, :]
    b0 = params["b0"].astype(f32)                  # (H,)
    gamma = params["gamma"].reshape(1, H).astype(f32)
    beta = params["beta"].reshape(1, H).astype(f32)
    w1_row = params["w1"].reshape(1, H).astype(f32)  # (H,1) -> (1,H) row
    b1 = params["b1"].reshape(1).astype(f32)         # (1,)  -> SMEM scalar

    # --- start-state contribution hoisted out of the kernel -----------------
    if start_positions is not None:
        ss = jnp.take_along_axis(
            hidden_states,
            start_positions[:, None, None].astype(jnp.int32), axis=1)  # (B,1,H)
        per_position = False
    else:
        ss = start_states                                              # (B,S,H)
        per_position = True
    s_bias = jnp.einsum(
        "bsh,hk->bsk",
        ss.astype(compute_dtype), w0s.astype(compute_dtype),
        preferred_element_type=f32) + b0[None, None, :]                # f32

    # --- sequence tiling / padding ------------------------------------------
    if S <= tile_s:
        TS = _round_up(S, 8)           # block second-minor must be 8-aligned
        S_pad = TS
    else:
        TS = tile_s                    # multiple of 128 -> lane-dense blocks
        S_pad = _round_up(S, TS)
    pad = S_pad - S
    n_s = S_pad // TS

    h = hidden_states.astype(compute_dtype)
    if pad:
        h = jnp.pad(h, ((0, 0), (0, pad), (0, 0)))

    if p_mask is None:
        pm = jnp.zeros((B, 1, S_pad), f32)
    else:
        pm = p_mask.astype(f32)[:, None, :]
        if pad:
            pm = jnp.pad(pm, ((0, 0), (0, 0), (0, pad)), constant_values=1.0)

    if per_position:
        if pad:
            s_bias = jnp.pad(s_bias, ((0, 0), (0, pad), (0, 0)))
        sb_block = (1, TS, H)
        sb_map = lambda b, s: (b, s, 0)
    else:
        sb_block = (1, 1, H)
        sb_map = lambda b, s: (b, 0, 0)

    out = pl.pallas_call(
        _pooler_end_logits_kernel,
        out_shape=jax.ShapeDtypeStruct((B, 1, S_pad), f32),
        grid_spec=pltpu.PrefetchScalarGridSpec(
            num_scalar_prefetch=0,
            grid=(B, n_s),
            in_specs=[
                pl.BlockSpec((1, TS, H), lambda b, s: (b, s, 0)),   # hidden
                pl.BlockSpec(sb_block, sb_map),                     # s_bias
                pl.BlockSpec((H, H), lambda b, s: (0, 0)),          # W0_h
                pl.BlockSpec((1, H), lambda b, s: (0, 0)),          # gamma
                pl.BlockSpec((1, H), lambda b, s: (0, 0)),          # beta
                pl.BlockSpec((1, H), lambda b, s: (0, 0)),          # W1 row
                pl.BlockSpec(memory_space=pltpu.MemorySpace.SMEM),  # b1 scalar
                pl.BlockSpec((1, 1, TS), lambda b, s: (b, 0, s)),   # p_mask
            ],
            out_specs=pl.BlockSpec((1, 1, TS), lambda b, s: (b, 0, s)),
        ),
        compiler_params=pltpu.CompilerParams(
            dimension_semantics=("parallel", "parallel"),
        ),
    )(h, s_bias, w0h.astype(compute_dtype), gamma, beta, w1_row, b1, pm)

    return out[:, 0, :S]                                            # (B, S)


def _reference(hidden_states, params, start_positions=None, start_states=None,
               p_mask=None):
    """Pure-JAX reference mirroring the PyTorch forward (f32)."""
    B, S, H = hidden_states.shape
    if start_positions is not None:
        ss = jnp.take_along_axis(
            hidden_states, start_positions[:, None, None].astype(jnp.int32), axis=1)
        ss = jnp.broadcast_to(ss, (B, S, H))
    else:
        ss = start_states
    x = jnp.concatenate([hidden_states, ss], axis=-1) @ params["w0"] + params["b0"]
    x = jnp.tanh(x)
    mean = jnp.mean(x, axis=-1, keepdims=True)
    var = jnp.mean((x - mean) ** 2, axis=-1, keepdims=True)
    x = (x - mean) / jnp.sqrt(var + LAYER_NORM_EPS)
    x = x * params["gamma"] + params["beta"]
    x = (x @ params["w1"] + params["b1"])[..., 0]
    if p_mask is not None:
        x = x * (1.0 - p_mask) - 1e30 * p_mask
    return x


if __name__ == "__main__":
    B, S, H = 2, 16, 32
    key = jax.random.PRNGKey(0)
    k_h, k_w0, k_w1, k_pos, k_mask, k_ss = jax.random.split(key, 6)

    hidden_states = jax.random.normal(k_h, (B, S, H), dtype=jnp.float32)
    start_positions = jax.random.randint(k_pos, (B,), 0, S, dtype=jnp.int32)
    p_mask = (jax.random.uniform(k_mask, (B, S)) < 0.2).astype(jnp.float32)

    # dense_0: Linear(2H -> H), LayerNorm(H), dense_1: Linear(H -> 1).
    params = {
        "w0": 0.02 * jax.random.normal(k_w0, (2 * H, H), dtype=jnp.float32),
        "b0": jnp.zeros((H,), jnp.float32),
        "gamma": jnp.ones((H,), jnp.float32),
        "beta": jnp.zeros((H,), jnp.float32),
        "w1": 0.02 * jax.random.normal(k_w1, (H, 1), dtype=jnp.float32),
        "b1": jnp.zeros((1,), jnp.float32),
    }

    # 1) start_positions path, f32 compute (tight tolerance).
    out_f32 = pooler_end_logits(hidden_states, params,
                                start_positions=start_positions, p_mask=p_mask,
                                compute_dtype=jnp.float32)
    out_f32 = jax.block_until_ready(out_f32)
    ref = _reference(hidden_states, params, start_positions=start_positions,
                     p_mask=p_mask)
    assert out_f32.shape == (B, S)
    assert jnp.allclose(out_f32, ref, rtol=1e-4, atol=1e-4), "f32 mismatch"

    # 2) start_positions path, bf16 matmuls with f32 accumulation (looser tol).
    out_bf16 = pooler_end_logits(hidden_states, params,
                                 start_positions=start_positions, p_mask=p_mask,
                                 compute_dtype=jnp.bfloat16)
    out_bf16 = jax.block_until_ready(out_bf16)
    assert jnp.allclose(out_bf16, ref, rtol=5e-2, atol=5e-2), "bf16 mismatch"

    # 3) general per-position start_states path (PyTorch semantics), f32.
    start_states = jax.random.normal(k_ss, (B, S, H), dtype=jnp.float32)
    out_ss = pooler_end_logits(hidden_states, params,
                               start_states=start_states, p_mask=p_mask,
                               compute_dtype=jnp.float32)
    out_ss = jax.block_until_ready(out_ss)
    ref_ss = _reference(hidden_states, params, start_states=start_states,
                        p_mask=p_mask)
    assert jnp.allclose(out_ss, ref_ss, rtol=1e-4, atol=1e-4), "start_states mismatch"

    print("KERNEL_OK")
</pallas_src>

<mosaic_0001>
module attributes {stable_mosaic.version = 11 : i64} {
  func.func @_pooler_end_logits_kernel(%arg0: i32, %arg1: i32, %arg2: memref<1x16x32xf32, #tpu.memory_space<vmem>>, %arg3: memref<1x1x32xf32, #tpu.memory_space<vmem>>, %arg4: memref<32x32xf32, #tpu.memory_space<vmem>>, %arg5: memref<1x32xf32, #tpu.memory_space<vmem>>, %arg6: memref<1x32xf32, #tpu.memory_space<vmem>>, %arg7: memref<1x32xf32, #tpu.memory_space<vmem>>, %arg8: memref<1xf32, #tpu.memory_space<smem>>, %arg9: memref<1x1x16xf32, #tpu.memory_space<vmem>>, %arg10: memref<1x1x16xf32, #tpu.memory_space<vmem>>) attributes {dimension_semantics = [#tpu.dimension_semantics<parallel>, #tpu.dimension_semantics<parallel>], iteration_bounds = array<i64: 2, 1>, scalar_prefetch = 0 : i64, scratch_operands = 0 : i64, tpu.core_type = #tpu.core_type<tc>, window_params = [{transform_indices = @transform_0, window_bounds = array<i64: 1, 16, 32>}, {transform_indices = @transform_1, window_bounds = array<i64: 1, 1, 32>}, {pipeline_mode = #tpu.pipeline_mode<synchronous>, transform_indices = @transform_2, window_bounds = array<i64: 32, 32>}, {pipeline_mode = #tpu.pipeline_mode<synchronous>, transform_indices = @transform_3, window_bounds = array<i64: 1, 32>}, {pipeline_mode = #tpu.pipeline_mode<synchronous>, transform_indices = @transform_4, window_bounds = array<i64: 1, 32>}, {pipeline_mode = #tpu.pipeline_mode<synchronous>, transform_indices = @transform_5, window_bounds = array<i64: 1, 32>}, {transform_indices = @transform_6, window_bounds = array<i64: 1>}, {transform_indices = @transform_7, window_bounds = array<i64: 1, 1, 16>}, {transform_indices = @transform_8, window_bounds = array<i64: 1, 1, 16>}]} {
    %c0 = arith.constant 0 : index
    %c0_0 = arith.constant 0 : index
    %c0_1 = arith.constant 0 : index
    %0 = vector.load %arg2[%c0, %c0_0, %c0_1] : memref<1x16x32xf32, #tpu.memory_space<vmem>>, vector<1x16x32xf32>
    %1 = vector.shape_cast %0 : vector<1x16x32xf32> to vector<16x32xf32>
    %c0_2 = arith.constant 0 : index
    %c0_3 = arith.constant 0 : index
    %2 = vector.load %arg4[%c0_2, %c0_3] : memref<32x32xf32, #tpu.memory_space<vmem>>, vector<32x32xf32>
    %cst = arith.constant dense<0.000000e+00> : vector<16x32xf32>
    %3 = tpu.matmul %1, %2, %cst {dimension_numbers = #tpu.dot_dimension_numbers<[1], [0], [0], [1], [0, 0, 1, 1], [], []>} : vector<16x32xf32>, vector<32x32xf32>, vector<16x32xf32> -> vector<16x32xf32>
    %c0_4 = arith.constant 0 : index
    %c0_5 = arith.constant 0 : index
    %c0_6 = arith.constant 0 : index
    %4 = vector.load %arg3[%c0_4, %c0_5, %c0_6] : memref<1x1x32xf32, #tpu.memory_space<vmem>>, vector<1x1x32xf32>
    %5 = vector.shape_cast %4 : vector<1x1x32xf32> to vector<1x32xf32>
    %6 = vector.broadcast %5 : vector<1x32xf32> to vector<16x32xf32>
    %7 = arith.addf %3, %6 : vector<16x32xf32>
    %8 = math.tanh %7 : vector<16x32xf32>
    %cst_7 = arith.constant dense<0.000000e+00> : vector<16xf32>
    %9 = vector.multi_reduction <add>, %8, %cst_7 [1] : vector<16x32xf32> to vector<16xf32>
    %10 = vector.shape_cast %9 : vector<16xf32> to vector<16x1xf32>
    %cst_8 = arith.constant 3.200000e+01 : f32
    %11 = vector.broadcast %cst_8 : f32 to vector<16x1xf32>
    %12 = arith.divf %10, %11 : vector<16x1xf32>
    %13 = arith.mulf %8, %8 : vector<16x32xf32>
    %cst_9 = arith.constant dense<0.000000e+00> : vector<16xf32>
    %14 = vector.multi_reduction <add>, %13, %cst_9 [1] : vector<16x32xf32> to vector<16xf32>
    %15 = vector.shape_cast %14 : vector<16xf32> to vector<16x1xf32>
    %cst_10 = arith.constant 3.200000e+01 : f32
    %16 = vector.broadcast %cst_10 : f32 to vector<16x1xf32>
    %17 = arith.divf %15, %16 : vector<16x1xf32>
    %18 = arith.mulf %12, %12 : vector<16x1xf32>
    %19 = arith.subf %17, %18 : vector<16x1xf32>
    %20 = vector.broadcast %12 : vector<16x1xf32> to vector<16x32xf32>
    %21 = arith.subf %8, %20 : vector<16x32xf32>
    %cst_11 = arith.constant 9.99999996E-13 : f32
    %22 = vector.broadcast %cst_11 : f32 to vector<16x1xf32>
    %23 = arith.addf %19, %22 : vector<16x1xf32>
    %24 = math.rsqrt %23 : vector<16x1xf32>
    %25 = vector.broadcast %24 : vector<16x1xf32> to vector<16x32xf32>
    %26 = arith.mulf %21, %25 : vector<16x32xf32>
    %c0_12 = arith.constant 0 : index
    %c0_13 = arith.constant 0 : index
    %27 = vector.load %arg5[%c0_12, %c0_13] : memref<1x32xf32, #tpu.memory_space<vmem>>, vector<1x32xf32>
    %28 = vector.broadcast %27 : vector<1x32xf32> to vector<16x32xf32>
    %29 = arith.mulf %26, %28 : vector<16x32xf32>
    %c0_14 = arith.constant 0 : index
    %c0_15 = arith.constant 0 : index
    %30 = vector.load %arg6[%c0_14, %c0_15] : memref<1x32xf32, #tpu.memory_space<vmem>>, vector<1x32xf32>
    %31 = vector.broadcast %30 : vector<1x32xf32> to vector<16x32xf32>
    %32 = arith.addf %29, %31 : vector<16x32xf32>
    %c0_16 = arith.constant 0 : index
    %c0_17 = arith.constant 0 : index
    %33 = vector.load %arg7[%c0_16, %c0_17] : memref<1x32xf32, #tpu.memory_space<vmem>>, vector<1x32xf32>
    %34 = vector.broadcast %33 : vector<1x32xf32> to vector<16x32xf32>
    %35 = arith.mulf %32, %34 : vector<16x32xf32>
    %cst_18 = arith.constant dense<0.000000e+00> : vector<16xf32>
    %36 = vector.multi_reduction <add>, %35, %cst_18 [1] : vector<16x32xf32> to vector<16xf32>
    %c0_19 = arith.constant 0 : index
    %37 = memref.load %arg8[%c0_19] : memref<1xf32, #tpu.memory_space<smem>>
    %38 = vector.broadcast %37 : f32 to vector<16xf32>
    %39 = arith.addf %36, %38 : vector<16xf32>
    %c0_20 = arith.constant 0 : index
    %c0_21 = arith.constant 0 : index
    %c0_22 = arith.constant 0 : index
    %40 = vector.load %arg9[%c0_20, %c0_21, %c0_22] : memref<1x1x16xf32, #tpu.memory_space<vmem>>, vector<1x1x16xf32>
    %41 = vector.shape_cast %40 : vector<1x1x16xf32> to vector<16xf32>
    %cst_23 = arith.constant 1.000000e+00 : f32
    %42 = vector.broadcast %cst_23 : f32 to vector<16xf32>
    %43 = arith.subf %42, %41 : vector<16xf32>
    %44 = arith.mulf %39, %43 : vector<16xf32>
    %cst_24 = arith.constant 1.000000e+30 : f32
    %45 = vector.broadcast %cst_24 : f32 to vector<16xf32>
    %46 = arith.mulf %45, %41 : vector<16xf32>
    %47 = arith.subf %44, %46 : vector<16xf32>
    %c0_25 = arith.constant 0 : index
    %c0_26 = arith.constant 0 : index
    %c0_27 = arith.constant 0 : index
    %48 = vector.load %arg10[%c0_25, %c0_26, %c0_27] : memref<1x1x16xf32, #tpu.memory_space<vmem>>, vector<1x1x16xf32>
    %49 = vector.shape_cast %48 : vector<1x1x16xf32> to vector<16xf32>
    %50 = vector.shape_cast %47 : vector<16xf32> to vector<1x1x16xf32>
    tpu.vector_store %arg10[%c0_25, %c0_26, %c0_27], %50 {strides = array<i32>} : memref<1x1x16xf32, #tpu.memory_space<vmem>>, vector<1x1x16xf32>,
    return
  }
  func.func @transform_0(%arg0: i32, %arg1: i32) -> (i32, i32, i32) {
    %c0_i32 = arith.constant 0 : i32
    %c0_i32_0 = arith.constant 0 : i32
    return %arg0, %arg1, %c0_i32 : i32, i32, i32
  }
  func.func @transform_1(%arg0: i32, %arg1: i32) -> (i32, i32, i32) {
    %c0_i32 = arith.constant 0 : i32
    %c0_i32_0 = arith.constant 0 : i32
    %c0_i32_1 = arith.constant 0 : i32
    return %arg0, %c0_i32, %c0_i32_0 : i32, i32, i32
  }
  func.func @transform_2(%arg0: i32, %arg1: i32) -> (i32, i32) {
    %c0_i32 = arith.constant 0 : i32
    %c0_i32_0 = arith.constant 0 : i32
    %c0_i32_1 = arith.constant 0 : i32
    return %c0_i32, %c0_i32_0 : i32, i32
  }
  func.func @transform_3(%arg0: i32, %arg1: i32) -> (i32, i32) {
    %c0_i32 = arith.constant 0 : i32
    %c0_i32_0 = arith.constant 0 : i32
    %c0_i32_1 = arith.constant 0 : i32
    return %c0_i32, %c0_i32_0 : i32, i32
  }
  func.func @transform_4(%arg0: i32, %arg1: i32) -> (i32, i32) {
    %c0_i32 = arith.constant 0 : i32
    %c0_i32_0 = arith.constant 0 : i32
    %c0_i32_1 = arith.constant 0 : i32
    return %c0_i32, %c0_i32_0 : i32, i32
  }
  func.func @transform_5(%arg0: i32, %arg1: i32) -> (i32, i32) {
    %c0_i32 = arith.constant 0 : i32
    %c0_i32_0 = arith.constant 0 : i32
    %c0_i32_1 = arith.constant 0 : i32
    return %c0_i32, %c0_i32_0 : i32, i32
  }
  func.func @transform_6(%arg0: i32, %arg1: i32) -> i32 {
    %c0_i32 = arith.constant 0 : i32
    %c0_i32_0 = arith.constant 0 : i32
    return %c0_i32 : i32
  }
  func.func @transform_7(%arg0: i32, %arg1: i32) -> (i32, i32, i32) {
    %c0_i32 = arith.constant 0 : i32
    %c0_i32_0 = arith.constant 0 : i32
    return %arg0, %c0_i32, %arg1 : i32, i32, i32
  }
  func.func @transform_8(%arg0: i32, %arg1: i32) -> (i32, i32, i32) {
    %c0_i32 = arith.constant 0 : i32
    %c0_i32_0 = arith.constant 0 : i32
    return %arg0, %c0_i32, %arg1 : i32, i32, i32
  }
}

</mosaic_0001>

<llo_original>
// kernel: tpu_custom_call.1
$region0: #{tpu_custom_call.1}
  #allocation0 [shape = 'u32[]', space=smem, size = 0x4, offset = 0x4, fixed_abs, tag = 'smem constant byte address 0x4 - core index']
  #allocation1 [shape = 'u32[144,128]{1,0:T(1,128)}', space=vmem, size = 0x12000, scoped, tag = 'internal scratch']
  #allocation2 [shape = 'f32[1]{0:T(128)S(6)}', space=smem, size = 0x200, scoped, tag = 'scoped memory for tpu_custom_call.1']
  %s0 = inlined_call_operand.hbm [shape: f32[2,16,32], index: 0, kind: input, shape index: {}]
  %s1 = inlined_call_operand.vmem [shape: f32[2,1,32], index: 1, kind: input, shape index: {}]
  %s2 = inlined_call_operand.hbm [shape: f32[32,32], index: 2, kind: input, shape index: {}]
  %s3 = inlined_call_operand.vmem [shape: f32[1,32], index: 3, kind: input, shape index: {}]
  %s4 = inlined_call_operand.vmem [shape: f32[1,32], index: 4, kind: input, shape index: {}]
  %s5 = inlined_call_operand.vmem [shape: f32[1,32], index: 5, kind: input, shape index: {}]
  %s6 = inlined_call_operand.<no memory space> [shape: f32[1], index: 6, kind: input, shape index: {}]
  %s7 = inlined_call_operand.vmem [shape: f32[2,1,16], index: 7, kind: input, shape index: {}]
  %s8 = inlined_call_operand.hbm [shape: f32[2,1,16], index: 8, kind: output, shape index: {}]
  %s9 = sld [smem:[#allocation0]]
  $region73: #{tpu_custom_call.1} parent=0
    _
  %s11 = ssub.s32 1, %s9
  %s12 = scalar_select 0, %s11, %s9
  %13 = sst [smem:[#allocation2]] %s6
  $region1: #{tpu_custom_call.1} parent=0
    #allocation3 [shape = 'u8[16384]{0}', space=vmem, size = 0x4000, scoped, tag = 'input window, operand 0']
    #allocation4 [shape = 's32[2]{0}', space=sflag, size = 0x8, scoped, tag = 'scoped memory for tpu_custom_call.1']
    #allocation5 [shape = 's32[2]{0}', space=sflag, size = 0x8, scoped, tag = 'scoped memory for tpu_custom_call.1']
    #allocation6 [shape = 'u8[16384]{0}', space=vmem, size = 0x4000, scoped, tag = 'input window, operand 2, single buffered']
    #allocation7 [shape = 's32[1]{0}', space=sflag, size = 0x4, scoped, tag = 'scoped memory for tpu_custom_call.1']
    #allocation8 [shape = 'u8[1024]{0}', space=vmem, size = 0x400, scoped, tag = 'output window, operand 0']
    %14 = vsyncpa [#allocation4], 0
    %s15 = scalar_lea.sflag [#allocation4], 1
    %16 = vsyncpa %s15, 0
    %17 = vsyncpa [#allocation7], 0
    %18 = vsyncpa [#allocation5], 0
    %s19 = scalar_lea.sflag [#allocation5], 1
    %20 = vsyncpa %s19, 0
    loop: start=0, step=1, limit=4
    $region2: #{tpu_custom_call.1} parent=1 // loop_pre_header
      _
    $region3: #{tpu_custom_call.1} parent=1 // loop_header
      %s22 = sphi 0, %s26
      %p23 = scmp.ge.s32.totalorder %s22, 4
      %s29 = sphi 0, %s41
      %s30 = sphi 0, %s37
      %s31 = sphi 0, %s29
      %s32 = sphi 0, %s30
      %s33 = sphi 0, %s31
      %s34 = sphi 0, %s32
      %s46 = sphi 0, %s48
      %s49 = sphi 0, %s46
      %s50 = sphi 0, %s49
      %s66 = sphi 0, %s50
      %s72 = sphi 0, %s74
      %s75 = sphi 0, %s72
      %s76 = sphi 0, %s75
      %s92 = sphi 0, %s76
      %s96 = sphi 0, %s96
      %s98 = sphi 0, %s96
      %s99 = sphi 0, %s98
      %s113 = sphi 0, %s99
      %s117 = sphi 0, %s117
      %s119 = sphi 0, %s117
      %s120 = sphi 0, %s119
      %s134 = sphi 0, %s120
      %s138 = sphi 0, %s138
      %s140 = sphi 0, %s138
      %s141 = sphi 0, %s140
      %s155 = sphi 0, %s141
      %s159 = sphi 0, %s159
      %s161 = sphi 0, %s159
      %s162 = sphi 0, %s161
      %s176 = sphi 0, %s162
      %s180 = sphi 0, %s180
      %s182 = sphi 0, %s180
      %s183 = sphi 0, %s182
      %s197 = sphi 0, %s183
      %s205 = sphi 0, %s207
      %s208 = sphi 0, %s205
      %s209 = sphi 0, %s208
      %s225 = sphi 0, %s209
      %s233 = sphi 0, %s235
      %s236 = sphi 0, %s233
      %s237 = sphi 0, %s236
      %s253 = sphi 0, %s237
    $region4: #{tpu_custom_call.1} parent=1 // loop_header_branch
      %25 = sbr.rel (%p23) target = $region8
    $region5: #{tpu_custom_call.1} parent=1 // loop_body
      %s27 = ssub.s32 %s22, 1
      %s28 = ssub.s32 %s22, 2
      %s35 = sadd.s32 1, %s30
      %p36 = scmp.ge.s32.totalorder %s35, 1
      %s37 = scalar_select %p36, 0, %s35
      %s38 = sadd.s32 1, %s29
      %s39 = scalar_select %p36, %s38, %s29
      %p40 = scmp.ge.s32.totalorder %s39, 2
      %s41 = scalar_select %p40, 0, %s39
      %s42 = ssub.s32 %s29, %s41
      %s43 = ssub.s32 %s30, %s37
      %s44 = sor.u32 %s42, %s43
      %p45 = scmp.eq.s32.totalorder %s44, 0
      %s47 = sadd.s32 %s46, 1
      %s48 = scalar_select %p45, %s46, %s47
      %p51 = pneg %p45
      %p52 = scmp.eq.s32.totalorder %s22, 1
      %p53 = por %p51, %p52
      %p54 = scmp.ne.s32.totalorder %s46, %s49
      %p55 = scmp.eq.s32.totalorder %s22, 0
      %p56 = por %p54, %p55
      %p57 = scmp.ne.s32.totalorder %s46, %s49
      %p58 = scmp.eq.s32.totalorder %s27, 1
      %p59 = por %p57, %p58
      %p60 = scmp.ne.s32.totalorder %s49, %s50
      %p61 = scmp.eq.s32.totalorder %s27, 0
      %p62 = por %p60, %p61
      %p63 = scmp.ne.s32.totalorder %s49, %s50
      %p64 = scmp.eq.s32.totalorder %s28, 1
      %p65 = por %p63, %p64
      %p67 = scmp.ne.s32.totalorder %s50, %s66
      %p68 = scmp.eq.s32.totalorder %s28, 0
      %p69 = por %p67, %p68
      %s70 = ssub.s32 %s29, %s41
      %p71 = scmp.eq.s32.totalorder %s70, 0
      %s73 = sadd.s32 %s72, 1
      %s74 = scalar_select %p71, %s72, %s73
      %p77 = pneg %p71
      %p78 = scmp.eq.s32.totalorder %s22, 1
      %p79 = por %p77, %p78
      %p80 = scmp.ne.s32.totalorder %s72, %s75
      %p81 = scmp.eq.s32.totalorder %s22, 0
      %p82 = por %p80, %p81
      %p83 = scmp.ne.s32.totalorder %s72, %s75
      %p84 = scmp.eq.s32.totalorder %s27, 1
      %p85 = por %p83, %p84
      %p86 = scmp.ne.s32.totalorder %s75, %s76
      %p87 = scmp.eq.s32.totalorder %s27, 0
      %p88 = por %p86, %p87
      %p89 = scmp.ne.s32.totalorder %s75, %s76
      %p90 = scmp.eq.s32.totalorder %s28, 1
      %p91 = por %p89, %p90
      %p93 = scmp.ne.s32.totalorder %s76, %s92
      %p94 = scmp.eq.s32.totalorder %s28, 0
      %p95 = por %p93, %p94
      %s97 = sadd.s32 %s96, 1
      %p100 = scmp.eq.s32.totalorder %s22, 1
      %p101 = scmp.ne.s32.totalorder %s96, %s98
      %p102 = scmp.eq.s32.totalorder %s22, 0
      %p103 = por %p101, %p102
      %p104 = scmp.ne.s32.totalorder %s96, %s98
      %p105 = scmp.eq.s32.totalorder %s27, 1
      %p106 = por %p104, %p105
      %p107 = scmp.ne.s32.totalorder %s98, %s99
      %p108 = scmp.eq.s32.totalorder %s27, 0
      %p109 = por %p107, %p108
      %p110 = scmp.ne.s32.totalorder %s98, %s99
      %p111 = scmp.eq.s32.totalorder %s28, 1
      %p112 = por %p110, %p111
      %p114 = scmp.ne.s32.totalorder %s99, %s113
      %p115 = scmp.eq.s32.totalorder %s28, 0
      %p116 = por %p114, %p115
      %s118 = sadd.s32 %s117, 1
      %p121 = scmp.eq.s32.totalorder %s22, 1
      %p122 = scmp.ne.s32.totalorder %s117, %s119
      %p123 = scmp.eq.s32.totalorder %s22, 0
      %p124 = por %p122, %p123
      %p125 = scmp.ne.s32.totalorder %s117, %s119
      %p126 = scmp.eq.s32.totalorder %s27, 1
      %p127 = por %p125, %p126
      %p128 = scmp.ne.s32.totalorder %s119, %s120
      %p129 = scmp.eq.s32.totalorder %s27, 0
      %p130 = por %p128, %p129
      %p131 = scmp.ne.s32.totalorder %s119, %s120
      %p132 = scmp.eq.s32.totalorder %s28, 1
      %p133 = por %p131, %p132
      %p135 = scmp.ne.s32.totalorder %s120, %s134
      %p136 = scmp.eq.s32.totalorder %s28, 0
      %p137 = por %p135, %p136
      %s139 = sadd.s32 %s138, 1
      %p142 = scmp.eq.s32.totalorder %s22, 1
      %p143 = scmp.ne.s32.totalorder %s138, %s140
      %p144 = scmp.eq.s32.totalorder %s22, 0
      %p145 = por %p143, %p144
      %p146 = scmp.ne.s32.totalorder %s138, %s140
      %p147 = scmp.eq.s32.totalorder %s27, 1
      %p148 = por %p146, %p147
      %p149 = scmp.ne.s32.totalorder %s140, %s141
      %p150 = scmp.eq.s32.totalorder %s27, 0
      %p151 = por %p149, %p150
      %p152 = scmp.ne.s32.totalorder %s140, %s141
      %p153 = scmp.eq.s32.totalorder %s28, 1
      %p154 = por %p152, %p153
      %p156 = scmp.ne.s32.totalorder %s141, %s155
      %p157 = scmp.eq.s32.totalorder %s28, 0
      %p158 = por %p156, %p157
      %s160 = sadd.s32 %s159, 1
      %p163 = scmp.eq.s32.totalorder %s22, 1
      %p164 = scmp.ne.s32.totalorder %s159, %s161
      %p165 = scmp.eq.s32.totalorder %s22, 0
      %p166 = por %p164, %p165
      %p167 = scmp.ne.s32.totalorder %s159, %s161
      %p168 = scmp.eq.s32.totalorder %s27, 1
      %p169 = por %p167, %p168
      %p170 = scmp.ne.s32.totalorder %s161, %s162
      %p171 = scmp.eq.s32.totalorder %s27, 0
      %p172 = por %p170, %p171
      %p173 = scmp.ne.s32.totalorder %s161, %s162
      %p174 = scmp.eq.s32.totalorder %s28, 1
      %p175 = por %p173, %p174
      %p177 = scmp.ne.s32.totalorder %s162, %s176
      %p178 = scmp.eq.s32.totalorder %s28, 0
      %p179 = por %p177, %p178
      %s181 = sadd.s32 %s180, 1
      %p184 = scmp.eq.s32.totalorder %s22, 1
      %p185 = scmp.ne.s32.totalorder %s180, %s182
      %p186 = scmp.eq.s32.totalorder %s22, 0
      %p187 = por %p185, %p186
      %p188 = scmp.ne.s32.totalorder %s180, %s182
      %p189 = scmp.eq.s32.totalorder %s27, 1
      %p190 = por %p188, %p189
      %p191 = scmp.ne.s32.totalorder %s182, %s183
      %p192 = scmp.eq.s32.totalorder %s27, 0
      %p193 = por %p191, %p192
      %p194 = scmp.ne.s32.totalorder %s182, %s183
      %p195 = scmp.eq.s32.totalorder %s28, 1
      %p196 = por %p194, %p195
      %p198 = scmp.ne.s32.totalorder %s183, %s197
      %p199 = scmp.eq.s32.totalorder %s28, 0
      %p200 = por %p198, %p199
      %s201 = ssub.s32 %s29, %s41
      %s202 = ssub.s32 %s30, %s37
      %s203 = sor.u32 %s201, %s202
      %p204 = scmp.eq.s32.totalorder %s203, 0
      %s206 = sadd.s32 %s205, 1
      %s207 = scalar_select %p204, %s205, %s206
      %p210 = pneg %p204
      %p211 = scmp.eq.s32.totalorder %s22, 1
      %p212 = por %p210, %p211
      %p213 = scmp.ne.s32.totalorder %s205, %s208
      %p214 = scmp.eq.s32.totalorder %s22, 0
      %p215 = por %p213, %p214
      %p216 = scmp.ne.s32.totalorder %s205, %s208
      %p217 = scmp.eq.s32.totalorder %s27, 1
      %p218 = por %p216, %p217
      %p219 = scmp.ne.s32.totalorder %s208, %s209
      %p220 = scmp.eq.s32.totalorder %s27, 0
      %p221 = por %p219, %p220
      %p222 = scmp.ne.s32.totalorder %s208, %s209
      %p223 = scmp.eq.s32.totalorder %s28, 1
      %p224 = por %p222, %p223
      %p226 = scmp.ne.s32.totalorder %s209, %s225
      %p227 = scmp.eq.s32.totalorder %s28, 0
      %p228 = por %p226, %p227
      %s229 = ssub.s32 %s29, %s41
      %s230 = ssub.s32 %s30, %s37
      %s231 = sor.u32 %s229, %s230
      %p232 = scmp.eq.s32.totalorder %s231, 0
      %s234 = sadd.s32 %s233, 1
      %s235 = scalar_select %p232, %s233, %s234
      %p238 = pneg %p232
      %p239 = scmp.eq.s32.totalorder %s22, 1
      %p240 = por %p238, %p239
      %p241 = scmp.ne.s32.totalorder %s233, %s236
      %p242 = scmp.eq.s32.totalorder %s22, 0
      %p243 = por %p241, %p242
      %p244 = scmp.ne.s32.totalorder %s233, %s236
      %p245 = scmp.eq.s32.totalorder %s27, 1
      %p246 = por %p244, %p245
      %p247 = scmp.ne.s32.totalorder %s236, %s237
      %p248 = scmp.eq.s32.totalorder %s27, 0
      %p249 = por %p247, %p248
      %p250 = scmp.ne.s32.totalorder %s236, %s237
      %p251 = scmp.eq.s32.totalorder %s28, 1
      %p252 = por %p250, %p251
      %p254 = scmp.ne.s32.totalorder %s237, %s253
      %p255 = scmp.eq.s32.totalorder %s28, 0
      %p256 = por %p254, %p255
      %p257 = scmp.le.s32.totalorder 1, %s22
      %p258 = scmp.lt.s32.totalorder %s22, 3
      %p259 = pnand %p257, %p258
      %p260 = pneg %p259
      // Predicated region
      $region9: #{tpu_custom_call.1} parent=5 // pred_check
        _
      $region10: #{tpu_custom_call.1} parent=5 // pred_check_branch
        %262 = sbr.rel (%p259) target = $region12
      $region11: #{tpu_custom_call.1} parent=5 // pred_region
        %s263 = ssub.s32 %s22, 1
        // Predicated region
        $region13: #{tpu_custom_call.1} parent=11 // pred_check
          %p264 = pneg %p109
        $region14: #{tpu_custom_call.1} parent=11 // pred_check_branch
          %266 = sbr.rel (%p264) target = $region16
        $region15: #{tpu_custom_call.1} parent=11 // pred_region
          %s268 = ssub.s32 512, 512
          %269 = vsyncadd [#allocation7], %s268
          %s270 = sshll.u32 [#allocation6], 4
          %s271 = int_to_ptr.vmem [resolvable:$true] %s270
          %276 = dma.hbm_to_vmem [thread:$0]  %s2, 512, %s271, [#allocation7], 128, 128, 8
        $region16: #{tpu_custom_call.1} parent=11 // pred_fallthru
          _
        // Predicated region
        $region17: #{tpu_custom_call.1} parent=11 // pred_check
          %p277 = pneg %p130
        $region18: #{tpu_custom_call.1} parent=11 // pred_check_branch
          %279 = sbr.rel (%p277) target = $region20
        $region19: #{tpu_custom_call.1} parent=11 // pred_region
          _
        $region20: #{tpu_custom_call.1} parent=11 // pred_fallthru
          _
        // Predicated region
        $region21: #{tpu_custom_call.1} parent=11 // pred_check
          %p280 = pneg %p151
        $region22: #{tpu_custom_call.1} parent=11 // pred_check_branch
          %282 = sbr.rel (%p280) target = $region24
        $region23: #{tpu_custom_call.1} parent=11 // pred_region
          _
        $region24: #{tpu_custom_call.1} parent=11 // pred_fallthru
          _
        // Predicated region
        $region25: #{tpu_custom_call.1} parent=11 // pred_check
          %p283 = pneg %p172
        $region26: #{tpu_custom_call.1} parent=11 // pred_check_branch
          %285 = sbr.rel (%p283) target = $region28
        $region27: #{tpu_custom_call.1} parent=11 // pred_region
          _
        $region28: #{tpu_custom_call.1} parent=11 // pred_fallthru
          _
        // Predicated region
        $region29: #{tpu_custom_call.1} parent=11 // pred_check
          %p286 = pneg %p193
        $region30: #{tpu_custom_call.1} parent=11 // pred_check_branch
          %288 = sbr.rel (%p286) target = $region32
        $region31: #{tpu_custom_call.1} parent=11 // pred_region
          _
        $region32: #{tpu_custom_call.1} parent=11 // pred_fallthru
          _
      $region12: #{tpu_custom_call.1} parent=5 // pred_fallthru
        _
      %p289 = scmp.lt.s32.totalorder %s22, 2
      // Predicated region
      $region33: #{tpu_custom_call.1} parent=5 // pred_check
        %p290 = pneg %p289
      $region34: #{tpu_custom_call.1} parent=5 // pred_check_branch
        %292 = sbr.rel (%p290) target = $region36
      $region35: #{tpu_custom_call.1} parent=5 // pred_region
        // Predicated region
        $region37: #{tpu_custom_call.1} parent=35 // pred_check
          %p293 = pneg %p56
        $region38: #{tpu_custom_call.1} parent=35 // pred_check_branch
          %295 = sbr.rel (%p293) target = $region40
        $region39: #{tpu_custom_call.1} parent=35 // pred_region
          %s296 = sand.u32 %s46, 1
          %s297 = scalar_lea.sflag [#allocation4], %s296
          %s298 = sand.u32 %s46, 1
          %s299 = smul.addr %s298, 16
          %s300 = scalar_lea.vmem [#allocation3], %s299
          %s301 = smul.u32 2, %s30
          %s303 = ssub.s32 256, 256
          %304 = vsyncadd %s297, %s303
          %s305 = smul.addr %s29, 2
          %s306 = sadd.s32 %s301, %s305
          %s307 = smul.addr %s306, 128
          %s308 = scalar_lea.hbm %s0, %s307
          %s309 = sshll.u32 %s300, 4
          %s310 = int_to_ptr.vmem [resolvable:$true] %s309
          %315 = dma.hbm_to_vmem [thread:$0]  %s308, 256, %s310, %s297, 128, 128, 8
        $region40: #{tpu_custom_call.1} parent=35 // pred_fallthru
          _
        // Predicated region
        $region41: #{tpu_custom_call.1} parent=35 // pred_check
          %p316 = pneg %p82
        $region42: #{tpu_custom_call.1} parent=35 // pred_check_branch
          %318 = sbr.rel (%p316) target = $region44
        $region43: #{tpu_custom_call.1} parent=35 // pred_region
          %p319 = scmp.lt.s32.totalorder %s29, 1
          %s320 = scalar_select %p319, %s29, 1
          %s321 = scalar_lea.vmem %s1, %s320
        $region44: #{tpu_custom_call.1} parent=35 // pred_fallthru
          _
        // Predicated region
        $region45: #{tpu_custom_call.1} parent=35 // pred_check
          %p322 = pneg %p215
        $region46: #{tpu_custom_call.1} parent=35 // pred_check_branch
          %324 = sbr.rel (%p322) target = $region48
        $region47: #{tpu_custom_call.1} parent=35 // pred_region
          %p325 = scmp.lt.s32.totalorder %s29, 1
          %s326 = scalar_select %p325, %s29, 1
          %p327 = scmp.lt.s32.totalorder %s30, 0
          %s328 = scalar_select %p327, %s30, 0
          %s329 = sadd.s32 %s328, %s326
          %s330 = scalar_lea.vmem %s7, %s329
        $region48: #{tpu_custom_call.1} parent=35 // pred_fallthru
          _
      $region36: #{tpu_custom_call.1} parent=5 // pred_fallthru
        _
      %p331 = scmp.le.s32.totalorder 1, %s22
      %p332 = scmp.lt.s32.totalorder %s22, 3
      %p333 = pnand %p331, %p332
      %p334 = pneg %p333
      // Predicated region
      $region49: #{tpu_custom_call.1} parent=5 // pred_check
        _
      $region50: #{tpu_custom_call.1} parent=5 // pred_check_branch
        %336 = sbr.rel (%p333) target = $region52
      $region51: #{tpu_custom_call.1} parent=5 // pred_region
        %s337 = ssub.s32 %s22, 1
        %s338 = sand.u32 %s49, 1
        %s339 = scalar_lea.sflag [#allocation4], %s338
        %s340 = sand.u32 %s49, 1
        %s341 = smul.addr %s340, 16
        %s342 = scalar_lea.vmem [#allocation3], %s341
        // Predicated region
        $region53: #{tpu_custom_call.1} parent=51 // pred_check
          %p343 = pneg %p62
        $region54: #{tpu_custom_call.1} parent=51 // pred_check_branch
          %345 = sbr.rel (%p343) target = $region56
        $region55: #{tpu_custom_call.1} parent=51 // pred_region
          %346 = dma.done %s339, 256
        $region56: #{tpu_custom_call.1} parent=51 // pred_fallthru
          _
        // Predicated region
        $region57: #{tpu_custom_call.1} parent=51 // pred_check
          %p347 = pneg %p109
        $region58: #{tpu_custom_call.1} parent=51 // pred_check_branch
          %349 = sbr.rel (%p347) target = $region60
        $region59: #{tpu_custom_call.1} parent=51 // pred_region
          %350 = dma.done [#allocation7], 512
        $region60: #{tpu_custom_call.1} parent=51 // pred_fallthru
          _
        %s351 = sand.u32 %s49, 1
        %s352 = scalar_lea.sflag [#allocation4], %s351
        %s353 = sand.u32 %s49, 1
        %s354 = smul.addr %s353, 16
        %s355 = scalar_lea.vmem [#allocation3], %s354
        %p356 = pneg %p62
        %p357 = pneg %p59
        %p358 = scmp.lt.s32.totalorder %s31, 1
        %s359 = scalar_select %p358, %s31, 1
        %s360 = scalar_lea.vmem %s1, %s359
        %p361 = pneg %p88
        %p362 = pneg %p85
        %p363 = pneg %p109
        %p364 = pneg %p106
        %p365 = pneg %p130
        %p366 = pneg %p127
        %p367 = pneg %p151
        %p368 = pneg %p148
        %p369 = pneg %p172
        %p370 = pneg %p169
        %p371 = pneg %p193
        %p372 = pneg %p190
        %p373 = scmp.lt.s32.totalorder %s31, 1
        %s374 = scalar_select %p373, %s31, 1
        %p375 = scmp.lt.s32.totalorder %s32, 0
        %s376 = scalar_select %p375, %s32, 0
        %s377 = sadd.s32 %s376, %s374
        %s378 = scalar_lea.vmem %s7, %s377
        %p379 = pneg %p221
        %p380 = pneg %p218
        %p381 = pneg %p249
        %p382 = pneg %p246
        %s383 = sand.u32 %s236, 1
        %s384 = scalar_lea.sflag [#allocation5], %s383
        %s385 = sand.u32 %s236, 1
        %s386 = scalar_lea.vmem [#allocation8], %s385
        %s387 = smul.u32 2, %s32
        %p388 = scmp.lt.s32.totalorder %s31, 1
        %s389 = scalar_select %p388, %s31, 1
        %s390 = scalar_lea.vmem %s1, %s389
        %p391 = scmp.lt.s32.totalorder %s31, 1
        %s392 = scalar_select %p391, %s31, 1
        %p393 = scmp.lt.s32.totalorder %s32, 0
        %s394 = scalar_select %p393, %s32, 0
        %s395 = sadd.s32 %s394, %s392
        %s396 = scalar_lea.vmem %s7, %s395
        %v397 = vld [vmem:[%s342] sm:$0xff]
        %v398 = vld [vmem:[%s342 + $0x8] sm:$0xff]
        %v399 = vld [vmem:[#allocation6] sm:$0xff]
        %v400 = vld [vmem:[#allocation6 + $0x8] sm:$0xff]
        %v401 = vld [vmem:[#allocation6 + $0x10] sm:$0xff]
        %v402 = vld [vmem:[#allocation6 + $0x18] sm:$0xff]
        %v403 = vld [vmem:[%s390] sm:$0x1]
        %v405 = vlaneseq
        %v406 = vshrl.u32 %v405, 7
        %v407 = vsub.s32 0, %v406
        %v408 = vrot.slane %v403, %v407
        %vm410 = vcmask 261120
        %v412 = vsel %vm410, %v397, 0
        %v415 = vsel %vm410, %v398, 0
        %417 = vmatprep.subr.mxu0 0.0
        %418 = vmatpush1.msra.mxu0 %v399
        %419 = vmatprep.subr.mxu0 0.0
        %420 = vmatpush1.msra.mxu0 %v400
        %421 = vmatprep.subr.mxu0 0.0
        %422 = vmatpush1.msra.mxu0 %v401
        %423 = vmatprep.subr.mxu0 0.0
        %424 = vmatpush1.msra.mxu0 %v402
        %425 = vmatprep.subr.mxu0 0.0
        %426 = vmatpush1.msra.mxu0 0.0
        %427 = vmatprep.subr.mxu0 0.0
        %428 = vmatpush1.msra.mxu0 0.0
        %429 = vmatprep.subr.mxu0 0.0
        %430 = vmatpush1.msra.mxu0 0.0
        %431 = vmatprep.subr.mxu0 0.0
        %432 = vmatpush1.msra.mxu0 0.0
        %433 = vmatprep.subr.mxu0 0.0
        %434 = vmatpush1.msra.mxu0 0.0
        %435 = vmatprep.subr.mxu0 0.0
        %436 = vmatpush1.msra.mxu0 0.0
        %437 = vmatprep.subr.mxu0 0.0
        %438 = vmatpush1.msra.mxu0 0.0
        %439 = vmatprep.subr.mxu0 0.0
        %440 = vmatpush1.msra.mxu0 0.0
        %441 = vmatprep.subr.mxu0 0.0
        %442 = vmatpush1.msra.mxu0 0.0
        %443 = vmatprep.subr.mxu0 0.0
        %444 = vmatpush1.msra.mxu0 0.0
        %445 = vmatprep.subr.mxu0 0.0
        %446 = vmatpush1.msra.mxu0 0.0
        %447 = vmatprep.subr.mxu0 0.0
        %448 = vmatpush1.msra.mxu0 0.0
        %449 = vmatprep.subr.mxu0 0.0
        %450 = vmatpush1.msra.mxu0 0.0
        %451 = vmatprep.subr.mxu0 0.0
        %452 = vmatpush1.msra.mxu0 0.0
        %453 = vmatprep.subr.mxu0 0.0
        %454 = vmatpush1.msra.mxu0 0.0
        %455 = vmatprep.subr.mxu0 0.0
        %456 = vmatpush1.msra.mxu0 0.0
        %457 = vmatprep.subr.mxu0 0.0
        %458 = vmatpush1.msra.mxu0 0.0
        %459 = vmatprep.subr.mxu0 0.0
        %460 = vmatpush1.msra.mxu0 0.0
        %461 = vmatprep.subr.mxu0 0.0
        %462 = vmatpush1.msra.mxu0 0.0
        %463 = vmatprep.subr.mxu0 0.0
        %464 = vmatpush1.msra.mxu0 0.0
        %465 = vmatprep.subr.mxu0 0.0
        %466 = vmatpush1.msra.mxu0 0.0
        %467 = vmatprep.subr.mxu0 0.0
        %468 = vmatpush1.msra.mxu0 0.0
        %469 = vmatprep.subr.mxu0 0.0
        %470 = vmatpush1.msra.mxu0 0.0
        %471 = vmatprep.subr.mxu0 0.0
        %472 = vmatpush1.msra.mxu0 0.0
        %473 = vmatprep.subr.mxu0 0.0
        %474 = vmatpush1.msra.mxu0 0.0
        %475 = vmatprep.subr.mxu0 0.0
        %476 = vmatpush1.msra.mxu0 0.0
        %477 = vmatprep.subr.mxu0 0.0
        %478 = vmatpush1.msra.mxu0 0.0
        %479 = vmatprep.subr.mxu0 0.0
        %480 = vmatpush1.msra.mxu0 0.0
        %481 = vmatprep.mubr.f32.mxu0 0.0
        %482 = vmatmul.mubr.f32.gmra.mrb[0].mxu0 %v412
        %v483 = vpop.f32.mrb[0].mxu0
        %v484 = vadd.f32 %v408, %v483
        %v485 = vpop.f32.mrb[0].mxu0
        %486 = vmatprep.mubr.f32.mxu0 0.0
        %487 = vmatmul.mubr.f32.gmra.mrb[0].mxu0 %v415
        %v488 = vpop.f32.mrb[0].mxu0
        %v489 = vadd.f32 %v408, %v488
        %v490 = vpop.f32.mrb[0].mxu0
        %491 = vdwg.mxu0
        %v492 = vtanh.pop %v484
        %v493 = vtanh.pop %v489
        %v494 = vsel %vm410, %v492, 0.0
        %495 = vadd.xlane.f32.xlu0 %v494
        %v496 = vpop.xlane.xlu0 %495
        %v497 = vsel %vm410, %v493, 0.0
        %498 = vadd.xlane.f32.xlu0 %v497
        %v499 = vpop.xlane.xlu0 %498
        %v500 = vrcp.pop 32.0
        %v501 = vmul.f32 %v496, %v500
        %v502 = vmul.f32 %v499, %v500
        %v503 = vmul.f32 %v492, %v492
        %v504 = vmul.f32 %v493, %v493
        %v505 = vsel %vm410, %v503, 0.0
        %506 = vadd.xlane.f32.xlu0 %v505
        %v507 = vpop.xlane.xlu0 %506
        %v508 = vsel %vm410, %v504, 0.0
        %509 = vadd.xlane.f32.xlu0 %v508
        %v510 = vpop.xlane.xlu0 %509
        %v511 = vmul.f32 %v507, %v500
        %v512 = vmul.f32 %v510, %v500
        %v513 = vmul.f32 %v501, %v501
        %v514 = vmul.f32 %v502, %v502
        %v515 = vsub.f32 %v511, %v513
        %v516 = vsub.f32 %v512, %v514
        %v517 = vsub.f32 %v492, %v501
        %v518 = vsub.f32 %v493, %v502
        %v519 = vadd.f32 %v515, 1e-12
        %v520 = vadd.f32 %v516, 1e-12
        %v521 = vrsqrt.pop %v519
        %v522 = vrsqrt.pop %v520
        %v523 = vmul.f32 %v517, %v521
        %v524 = vmul.f32 %v518, %v522
        %v525 = vld [vmem:[%s3] sm:$0x1]
        %v527 = vlaneseq
        %v528 = vshrl.u32 %v527, 7
        %v529 = vsub.s32 0, %v528
        %v530 = vrot.slane %v525, %v529
        %v532 = vmul.f32 %v523, %v530
        %v533 = vmul.f32 %v524, %v530
        %v534 = vld [vmem:[%s4] sm:$0x1]
        %v536 = vlaneseq
        %v537 = vshrl.u32 %v536, 7
        %v538 = vsub.s32 0, %v537
        %v539 = vrot.slane %v534, %v538
        %v541 = vadd.f32 %v532, %v539
        %v542 = vadd.f32 %v533, %v539
        %v543 = vld [vmem:[%s5] sm:$0x1]
        %v545 = vlaneseq
        %v546 = vshrl.u32 %v545, 7
        %v547 = vsub.s32 0, %v546
        %v548 = vrot.slane %v543, %v547
        %v550 = vmul.f32 %v541, %v548
        %v551 = vmul.f32 %v542, %v548
        %v552 = vsel %vm410, %v550, 0.0
        %553 = vadd.xlane.f32.xlu0 %v552
        %v554 = vpop.xlane.xlu0 %553
        %v555 = vsel %vm410, %v551, 0.0
        %556 = vadd.xlane.f32.xlu0 %v555
        %v557 = vpop.xlane.xlu0 %556
        %s558 = sld [smem:[#allocation2]]
        %v559 = vstv %s558
        %v560 = vadd.f32 %v554, %v559
        %v561 = vadd.f32 %v557, %v559
        %v562 = vld [vmem:[%s396] sm:$0x1]
        %v563 = vsub.f32 1.0, %v562
        %v565 = vlaneseq
        %v566 = vshrl.u32 %v565, 7
        %v567 = vsub.s32 0, %v566
        %v568 = vrot.slane %v563, %v567
        %570 = vbcast.lane.b32.xlu0 %v568, 256
        %v571 = vpop.permute.xlu0 %570
        %s573 = sor.u32 256, 8
        %574 = vbcast.lane.b32.xlu0 %v568, %s573
        %v575 = vpop.permute.xlu0 %574
        %v578 = vmul.f32 %v560, %v571
        %v579 = vmul.f32 %v561, %v575
        %v580 = vmul.f32 %v562, 1e+30
        %v582 = vlaneseq
        %v583 = vshrl.u32 %v582, 7
        %v584 = vsub.s32 0, %v583
        %v585 = vrot.slane %v580, %v584
        %587 = vbcast.lane.b32.xlu0 %v585, 256
        %v588 = vpop.permute.xlu0 %587
        %s590 = sor.u32 256, 8
        %591 = vbcast.lane.b32.xlu0 %v585, %s590
        %v592 = vpop.permute.xlu0 %591
        %v595 = vsub.f32 %v578, %v588
        %v596 = vsub.f32 %v579, %v592
        %599 = vset.pattern.permute.xlu0 0
        %600 = vperm.xlu0 %599, %v595
        %v601 = vpop.permute.xlu0 %600
        %602 = vset.pattern.permute.xlu0 0
        %603 = vperm.xlu0 %602, %v596
        %v604 = vpop.permute.xlu0 %603
        %v605 = vlaneseq
        %v606 = vand.u32 %v605, 127
        %v607 = vlaneseq
        %v608 = vshrl.u32 %v607, 7
        %v609 = vsub.s32 %v606, %v608
        %v610 = vrot.slane %v601, %v609
        %v611 = vadd.s32 %v606, 4294967288
        %v612 = vlaneseq
        %v613 = vshrl.u32 %v612, 7
        %v614 = vsub.s32 %v611, %v613
        %v615 = vrot.slane %v604, %v614
        %vm616 = vcmask 130112
        %v617 = vsel %vm616, %v615, %v610
        %vm619 = vcmask 122880
        %620 = vst.msk [vmem:[%s386] sm:$0x1] %vm619, %v617
        %s621 = sand.u32 %s236, 1
        %s622 = scalar_lea.sflag [#allocation5], %s621
        %s623 = sand.u32 %s236, 1
        %s624 = scalar_lea.vmem [#allocation8], %s623
        // Predicated region
        $region61: #{tpu_custom_call.1} parent=51 // pred_check
          %p625 = pneg %p246
        $region62: #{tpu_custom_call.1} parent=51 // pred_check_branch
          %627 = sbr.rel (%p625) target = $region64
        $region63: #{tpu_custom_call.1} parent=51 // pred_region
          %s629 = ssub.s32 16, 16
          %630 = vsyncadd %s622, %s629
          %s631 = sadd.s32 %s32, %s31
          %s632 = smul.addr %s631, 16
          %s633 = scalar_lea.hbm %s8, %s632
          %s635 = sshll.u32 %s624, 4
          %s636 = int_to_ptr.vmem [resolvable:$true] %s635
          %638 = dma.vmem_to_hbm [thread:$0]  %s636, 16, %s633, %s622
        $region64: #{tpu_custom_call.1} parent=51 // pred_fallthru
          _
      $region52: #{tpu_custom_call.1} parent=5 // pred_fallthru
        _
      %p639 = scmp.le.s32.totalorder 2, %s22
      // Predicated region
      $region65: #{tpu_custom_call.1} parent=5 // pred_check
        %p640 = pneg %p639
      $region66: #{tpu_custom_call.1} parent=5 // pred_check_branch
        %642 = sbr.rel (%p640) target = $region68
      $region67: #{tpu_custom_call.1} parent=5 // pred_region
        %s643 = ssub.s32 %s22, 2
        // Predicated region
        $region69: #{tpu_custom_call.1} parent=67 // pred_check
          %p644 = pneg %p252
        $region70: #{tpu_custom_call.1} parent=67 // pred_check_branch
          %646 = sbr.rel (%p644) target = $region72
        $region71: #{tpu_custom_call.1} parent=67 // pred_region
          %s647 = sand.u32 %s237, 1
          %s648 = scalar_lea.sflag [#allocation5], %s647
          %s649 = sand.u32 %s237, 1
          %s650 = scalar_lea.vmem [#allocation8], %s649
          %651 = dma.done %s648, 16
        $region72: #{tpu_custom_call.1} parent=67 // pred_fallthru
          _
      $region68: #{tpu_custom_call.1} parent=5 // pred_fallthru
        _
    $region6: #{tpu_custom_call.1} parent=1 // loop_footer
      %s26 = sadd.s32 1, %s22
    $region7: #{tpu_custom_call.1} parent=1 // loop_footer_branch
      %21 = sbr.rel target = $region3
    $region8: #{tpu_custom_call.1} parent=1 // loop_exit
      _
    %652 = vsyncpa [#allocation4], 1
    %s653 = scalar_lea.sflag [#allocation4], 1
    %654 = vsyncpa %s653, 1
    %655 = vsyncpa [#allocation7], 1
    %656 = vsyncpa [#allocation5], 1
    %s657 = scalar_lea.sflag [#allocation5], 1
    %658 = vsyncpa %s657, 1

</llo_original>
